<compile_context>
chip_gen: v7x
topology: tpu7x:2x2x1
jax: 0.10.0
libtpu: 0.0.40
codegen_flags: <defaults>
</compile_context>

<pallas_src>
import functools

import jax
import jax.numpy as jnp
from jax.experimental import pallas as pl
from jax.experimental.pallas import tpu as pltpu

_LANE = 128


def _round_up(x, m):
    return (x + m - 1) // m * m


def _default_vmem_budget_bytes():
    """Double-buffered working-set budget, per TPU generation."""
    try:
        cap = int(pltpu.get_tpu_info().vmem_capacity_bytes)
    except Exception:
        cap = 64 << 20                      # be conservative (v7x-sized)
    if cap >= (100 << 20):                  # v5e / v6e: 128 MiB physical VMEM
        return 56 << 20
    return 40 << 20                         # v7x: 64 MiB physical VMEM


def _focal_weight(one_minus_pt, gamma):
    """(1 - pt)**gamma; small integer gamma uses repeated multiplies
    (no exp/log pair, no NaN hazard when 1-pt rounds slightly negative)."""
    g = float(gamma)
    if g == int(g) and 0 <= int(g) <= 4:
        w = jnp.ones_like(one_minus_pt)
        for _ in range(int(g)):
            w = w * one_minus_pt
        return w
    return jnp.power(one_minus_pt, g)


def _finalize_and_store(log_pt, out_ref, *, alpha, gamma, row_offset, total_n):
    """Common epilogue: focal loss from log(pt), row mask, per-tile partial sum."""
    pt = jnp.exp(log_pt)
    one_minus_pt = jnp.maximum(1.0 - pt, 0.0)        # clamp fp rounding above 1
    w = _focal_weight(one_minus_pt, gamma)
    batch_loss = (-alpha) * w * log_pt               # (TB, 1)

    # Mask rows beyond N (partial last tile; padded rows may hold garbage).
    row = jax.lax.broadcasted_iota(jnp.int32, batch_loss.shape, 0)
    batch_loss = jnp.where((row_offset + row) < total_n, batch_loss, 0.0)

    # Lane-dense per-tile partial block: zero it, drop the scalar at [0,0,0].
    out_ref[...] = jnp.zeros_like(out_ref)
    out_ref[0:1, 0:1, 0:1] = jnp.sum(batch_loss).reshape(1, 1, 1)


# --------------------------------------------------------------------------
# Path 1: whole class axis fits one VMEM tile (single pass over C).
# --------------------------------------------------------------------------
def _focal_loss_kernel(logits_ref, targets_ref, out_ref, *,
                       alpha, gamma, batch_tile, total_n):
    i = pl.program_id(0)

    x = logits_ref[...].astype(jnp.float32)          # (TB, C)  f32 math
    t = targets_ref[...]                             # (TB, 1)  int32

    # Stable log-softmax pieces over the class axis (lanes).
    m = jnp.max(x, axis=1, keepdims=True)            # (TB, 1)
    xm = x - m                                       # reused by exp and gather
    s = jnp.sum(jnp.exp(xm), axis=1, keepdims=True)  # (TB, 1)
    # TODO(synk): on v6e/v7x the denominator exp could run packed in bf16 on
    # the EUP; kept f32 so the same kernel stays safe on v5e (no bf16 EUP/VPU).

    # "gather(1, targets)" via a one-hot mask on (x - m) + lane reduction, so
    # log_pt needs no extra per-row subtract.
    col = jax.lax.broadcasted_iota(jnp.int32, x.shape, 1)
    xm_t = jnp.sum(jnp.where(col == t, xm, 0.0), axis=1, keepdims=True)

    log_pt = xm_t - jnp.log(s)                       # == log(softmax(x)[t])
    _finalize_and_store(log_pt, out_ref, alpha=alpha, gamma=gamma,
                        row_offset=i * batch_tile, total_n=total_n)


# --------------------------------------------------------------------------
# Path 2: vocab-scale C — class-tiled online (flash-style) log-softmax.
# --------------------------------------------------------------------------
def _focal_loss_kernel_classtiled(logits_ref, targets_ref, out_ref,
                                  m_sc, s_sc, xt_sc, *,
                                  alpha, gamma, batch_tile, class_tile,
                                  total_n, total_c):
    i = pl.program_id(0)
    c = pl.program_id(1)

    @pl.when(c == 0)
    def _():
        m_sc[...] = jnp.full_like(m_sc, -jnp.inf)
        s_sc[...] = jnp.zeros_like(s_sc)
        xt_sc[...] = jnp.zeros_like(xt_sc)

    x = logits_ref[...].astype(jnp.float32)          # (TB, TC)
    t = targets_ref[...]                             # (TB, 1)

    # Global class index of each lane; mask columns past C (padded last block).
    col = jax.lax.broadcasted_iota(jnp.int32, x.shape, 1) + c * class_tile
    x_m = jnp.where(col < total_c, x, -jnp.inf)

    # Online running max / running sum-exp.
    m_prev = m_sc[...]
    m_new = jnp.maximum(m_prev, jnp.max(x_m, axis=1, keepdims=True))
    s_sc[...] = (s_sc[...] * jnp.exp(m_prev - m_new) +
                 jnp.sum(jnp.exp(x_m - m_new), axis=1, keepdims=True))
    m_sc[...] = m_new

    # Accumulate the target logit (exactly one class block matches per row).
    xt_sc[...] = xt_sc[...] + jnp.sum(jnp.where(col == t, x, 0.0),
                                      axis=1, keepdims=True)

    @pl.when(c == pl.num_programs(1) - 1)
    def _():
        log_pt = (xt_sc[...] - m_sc[...]) - jnp.log(s_sc[...])
        _finalize_and_store(log_pt, out_ref, alpha=alpha, gamma=gamma,
                            row_offset=i * batch_tile, total_n=total_n)


def focal_loss(logits, targets, *, alpha=1.0, gamma=2.0, size_average=True,
               batch_tile=None, class_tile=None, vmem_budget_bytes=None):
    """logits: (N, C) float32/bfloat16; targets: (N,) int. Returns scalar f32."""
    N, C = logits.shape
    dtype_bytes = jnp.dtype(logits.dtype).itemsize
    sub = 16 if dtype_bytes < 4 else 8               # sublane packing multiple
    c_pad = _round_up(C, _LANE)                      # lane-padded class extent
    tgt_row_bytes = _LANE * 4                        # (TB,1) int32 pads to 128 lanes
    n_pad = _round_up(N, sub)

    budget = (int(vmem_budget_bytes) if vmem_budget_bytes is not None
              else _default_vmem_budget_bytes())

    targets2d = targets.reshape(-1, 1).astype(jnp.int32)   # targets.view(-1, 1)

    # Rows of a full-C tile fitting the double-buffered PADDED working set.
    per_row_vmem = c_pad * dtype_bytes + tgt_row_bytes
    rows_fit = budget // (2 * per_row_vmem)

    use_class_tiling = (class_tile is not None) or (rows_fit < min(256, n_pad))

    alpha_f, gamma_f = float(alpha), float(gamma)
    out_tile_bytes = 8 * _LANE * 4

    if not use_class_tiling:
        # ---- single pass over C (whole class axis in lanes) ----------------
        if batch_tile is None:
            # Byte-based cap: grow the tile until the logits block carries
            # ~8 MiB of HBM payload, bounded by the padded VMEM budget.
            target_payload = 8 << 20
            rows_payload = max(sub, target_payload // max(C * dtype_bytes, 1))
            rows = min(rows_fit, rows_payload, n_pad)
            tb = max(sub, (rows // sub) * sub)
        else:
            tb = min(max(sub, _round_up(int(batch_tile), sub)), n_pad)
        grid_n = pl.cdiv(N, tb)

        vmem_limit = 2 * (tb * c_pad * dtype_bytes + tb * tgt_row_bytes
                          + out_tile_bytes) + (2 << 20)
        vmem_limit = max(vmem_limit, 16 << 20)

        kernel = functools.partial(
            _focal_loss_kernel, alpha=alpha_f, gamma=gamma_f,
            batch_tile=int(tb), total_n=int(N))

        grid_spec = pltpu.PrefetchScalarGridSpec(
            num_scalar_prefetch=0,
            grid=(grid_n,),
            in_specs=[pl.BlockSpec((tb, C), lambda i: (i, 0)),    # logits tile
                      pl.BlockSpec((tb, 1), lambda i: (i, 0))],   # targets tile
            out_specs=pl.BlockSpec((1, 8, _LANE), lambda i: (i, 0, 0)),
        )
        dim_sem = ("parallel",)
    else:
        # ---- vocab-scale C: class-tiled online log-softmax -----------------
        tb = min(256, n_pad) if batch_tile is None else min(int(batch_tile), n_pad)
        tb = max(sub, _round_up(tb, sub))

        if class_tile is None:
            fixed = (2 * tb * tgt_row_bytes          # targets (double-buffered)
                     + 3 * tb * _LANE * 4            # m / s / x_t scratch
                     + 2 * out_tile_bytes)
            logits_budget = max(budget - fixed, 2 * tb * _LANE * dtype_bytes)
            tc = (logits_budget // (2 * tb * dtype_bytes) // _LANE) * _LANE
        else:
            tc = _round_up(int(class_tile), _LANE)
        tc = max(_LANE, min(tc, c_pad))

        grid_n = pl.cdiv(N, tb)
        grid_c = pl.cdiv(C, tc)

        vmem_limit = (2 * (tb * tc * dtype_bytes + tb * tgt_row_bytes
                           + out_tile_bytes)
                      + 3 * tb * _LANE * 4 + (2 << 20))
        vmem_limit = max(vmem_limit, 16 << 20)

        kernel = functools.partial(
            _focal_loss_kernel_classtiled, alpha=alpha_f, gamma=gamma_f,
            batch_tile=int(tb), class_tile=int(tc),
            total_n=int(N), total_c=int(C))

        grid_spec = pltpu.PrefetchScalarGridSpec(
            num_scalar_prefetch=0,
            grid=(grid_n, grid_c),
            in_specs=[pl.BlockSpec((tb, tc), lambda i, c: (i, c)),
                      pl.BlockSpec((tb, 1), lambda i, c: (i, 0))],
            out_specs=pl.BlockSpec((1, 8, _LANE), lambda i, c: (i, 0, 0)),
            scratch_shapes=[pltpu.VMEM((tb, 1), jnp.float32)] * 3,
        )
        dim_sem = ("parallel", "arbitrary")

    cost = pl.CostEstimate(
        flops=int(6 * N * C),
        transcendentals=int(N * C),
        bytes_accessed=int(N * C * dtype_bytes + N * 4 + grid_n * 8 * _LANE * 4),
    )

    partials = pl.pallas_call(
        kernel,
        out_shape=jax.ShapeDtypeStruct((grid_n, 8, _LANE), jnp.float32),
        grid_spec=grid_spec,
        compiler_params=pltpu.CompilerParams(
            dimension_semantics=dim_sem,
            vmem_limit_bytes=int(vmem_limit),
        ),
        cost_estimate=cost,
    )(logits, targets2d)

    total = jnp.sum(partials)                        # tiny epilogue in XLA
    if size_average:
        return total / jnp.float32(N)
    return total


def _focal_loss_ref(logits, targets, alpha=1.0, gamma=2.0, size_average=True):
    """Pure-JAX reference mirroring the PyTorch module (default path)."""
    prob = jax.nn.softmax(logits.astype(jnp.float32), axis=1)
    pt = jnp.take_along_axis(prob, targets.reshape(-1, 1), axis=1)
    batch_loss = -alpha * jnp.power(1.0 - pt, gamma) * jnp.log(pt)
    return batch_loss.mean() if size_average else batch_loss.sum()


if __name__ == "__main__":
    key = jax.random.PRNGKey(0)
    k1, k2, k3, k4, k5, k6 = jax.random.split(key, 6)

    # Test 1: f32 logits, mean reduction (single-pass path).
    N, C = 32, 16
    logits = jax.random.normal(k1, (N, C), dtype=jnp.float32)
    targets = jax.random.randint(k2, (N,), 0, C, dtype=jnp.int32)
    loss = jax.block_until_ready(
        focal_loss(logits, targets, alpha=1.0, gamma=2.0, size_average=True))
    ref = _focal_loss_ref(logits, targets)
    assert jnp.allclose(loss, ref, rtol=1e-5, atol=1e-6), (loss, ref)

    # Test 2: bf16 logits, N not a multiple of the sublane tile, sum reduction.
    N2, C2 = 37, 24
    logits2 = jax.random.normal(k3, (N2, C2), dtype=jnp.float32).astype(jnp.bfloat16)
    targets2 = jax.random.randint(k4, (N2,), 0, C2, dtype=jnp.int32)
    loss2 = jax.block_until_ready(
        focal_loss(logits2, targets2, alpha=1.0, gamma=2.0, size_average=False))
    ref2 = _focal_loss_ref(logits2.astype(jnp.float32), targets2, size_average=False)
    assert jnp.allclose(loss2, ref2, rtol=1e-4, atol=1e-5), (loss2, ref2)

    # Test 3: force the class-tiled (online log-softmax) path; C not a multiple
    # of the class tile, N not a multiple of the row tile.
    N3, C3 = 37, 300
    logits3 = jax.random.normal(k5, (N3, C3), dtype=jnp.float32)
    targets3 = jax.random.randint(k6, (N3,), 0, C3, dtype=jnp.int32)
    loss3 = jax.block_until_ready(
        focal_loss(logits3, targets3, alpha=1.0, gamma=2.0, size_average=True,
                   class_tile=128))
    ref3 = _focal_loss_ref(logits3, targets3)
    assert jnp.allclose(loss3, ref3, rtol=1e-4, atol=1e-6), (loss3, ref3)

    print("KERNEL_OK")
</pallas_src>

<mosaic_0001>
module attributes {stable_mosaic.version = 11 : i64} {
  func.func @_focal_loss_kernel(%arg0: i32, %arg1: memref<32x16xf32, #tpu.memory_space<vmem>>, %arg2: memref<32x1xi32, #tpu.memory_space<vmem>>, %arg3: memref<1x8x128xf32, #tpu.memory_space<vmem>>) attributes {dimension_semantics = [#tpu.dimension_semantics<parallel>], iteration_bounds = array<i64: 1>, scalar_prefetch = 0 : i64, scratch_operands = 0 : i64, tpu.core_type = #tpu.core_type<tc>, window_params = [{transform_indices = @transform_0, window_bounds = array<i64: 32, 16>}, {transform_indices = @transform_1, window_bounds = array<i64: 32, 1>}, {transform_indices = @transform_2, window_bounds = array<i64: 1, 8, 128>}]} {
    %c0 = arith.constant 0 : index
    %c0_0 = arith.constant 0 : index
    %0 = vector.load %arg1[%c0, %c0_0] : memref<32x16xf32, #tpu.memory_space<vmem>>, vector<32x16xf32>
    %c0_1 = arith.constant 0 : index
    %c0_2 = arith.constant 0 : index
    %1 = vector.load %arg2[%c0_1, %c0_2] : memref<32x1xi32, #tpu.memory_space<vmem>>, vector<32x1xi32>
    %cst = arith.constant dense<0xFF800000> : vector<32xf32>
    %2 = vector.multi_reduction <maximumf>, %0, %cst [1] : vector<32x16xf32> to vector<32xf32>
    %3 = vector.shape_cast %2 : vector<32xf32> to vector<32x1xf32>
    %4 = vector.broadcast %3 : vector<32x1xf32> to vector<32x16xf32>
    %5 = arith.subf %0, %4 : vector<32x16xf32>
    %6 = math.exp %5 : vector<32x16xf32>
    %cst_3 = arith.constant dense<0.000000e+00> : vector<32xf32>
    %7 = vector.multi_reduction <add>, %6, %cst_3 [1] : vector<32x16xf32> to vector<32xf32>
    %8 = vector.shape_cast %7 : vector<32xf32> to vector<32x1xf32>
    %9 = tpu.iota {dimensions = array<i32: 1>} : vector<32x16xi32>
    %10 = vector.broadcast %1 : vector<32x1xi32> to vector<32x16xi32>
    %11 = arith.cmpi eq, %9, %10 : vector<32x16xi32>
    %cst_4 = arith.constant 0.000000e+00 : f32
    %12 = vector.broadcast %cst_4 : f32 to vector<32x16xf32>
    %13 = arith.select %11, %5, %12 : vector<32x16xi1>, vector<32x16xf32>
    %cst_5 = arith.constant dense<0.000000e+00> : vector<32xf32>
    %14 = vector.multi_reduction <add>, %13, %cst_5 [1] : vector<32x16xf32> to vector<32xf32>
    %15 = vector.shape_cast %14 : vector<32xf32> to vector<32x1xf32>
    %16 = math.log %8 : vector<32x1xf32>
    %17 = arith.subf %15, %16 : vector<32x1xf32>
    %c32_i32 = arith.constant 32 : i32
    %18 = arith.muli %arg0, %c32_i32 : i32
    %19 = math.exp %17 : vector<32x1xf32>
    %cst_6 = arith.constant 1.000000e+00 : f32
    %20 = vector.broadcast %cst_6 : f32 to vector<32x1xf32>
    %21 = arith.subf %20, %19 : vector<32x1xf32>
    %cst_7 = arith.constant 0.000000e+00 : f32
    %22 = vector.broadcast %cst_7 : f32 to vector<32x1xf32>
    %23 = arith.maximumf %21, %22 : vector<32x1xf32>
    %cst_8 = arith.constant 1.000000e+00 : f32
    %24 = vector.broadcast %cst_8 : f32 to vector<32x1xf32>
    %25 = arith.mulf %24, %23 : vector<32x1xf32>
    %26 = arith.mulf %25, %23 : vector<32x1xf32>
    %cst_9 = arith.constant -1.000000e+00 : f32
    %27 = vector.broadcast %cst_9 : f32 to vector<32x1xf32>
    %28 = arith.mulf %27, %26 : vector<32x1xf32>
    %29 = arith.mulf %28, %17 : vector<32x1xf32>
    %30 = tpu.iota {dimensions = array<i32: 0>} : vector<32x1xi32>
    %31 = vector.broadcast %18 : i32 to vector<32x1xi32>
    %32 = arith.addi %31, %30 : vector<32x1xi32>
    %c32_i32_10 = arith.constant 32 : i32
    %33 = vector.broadcast %c32_i32_10 : i32 to vector<32x1xi32>
    %34 = arith.cmpi slt, %32, %33 : vector<32x1xi32>
    %cst_11 = arith.constant 0.000000e+00 : f32
    %35 = vector.broadcast %cst_11 : f32 to vector<32x1xf32>
    %36 = arith.select %34, %29, %35 : vector<32x1xi1>, vector<32x1xf32>
    %cst_12 = arith.constant 0.000000e+00 : f32
    %37 = vector.broadcast %cst_12 : f32 to vector<1x8x128xf32>
    %c0_13 = arith.constant 0 : index
    %c0_14 = arith.constant 0 : index
    %c0_15 = arith.constant 0 : index
    %38 = vector.load %arg3[%c0_13, %c0_14, %c0_15] : memref<1x8x128xf32, #tpu.memory_space<vmem>>, vector<1x8x128xf32>
    tpu.vector_store %arg3[%c0_13, %c0_14, %c0_15], %37 {strides = array<i32>} : memref<1x8x128xf32, #tpu.memory_space<vmem>>, vector<1x8x128xf32>,
    %39 = vector.shape_cast %36 : vector<32x1xf32> to vector<1x32x1xf32>
    %cst_16 = arith.constant dense<0.000000e+00> : vector<1xf32>
    %40 = vector.multi_reduction <add>, %39, %cst_16 [1, 2] : vector<1x32x1xf32> to vector<1xf32>
    %41 = vector.shape_cast %40 : vector<1xf32> to vector<1x1x1xf32>
    %42 = vector.extract %41[0, 0, 0] : f32 from vector<1x1x1xf32>
    %43 = vector.broadcast %42 : f32 to vector<1x1x1xf32>
    %c0_17 = arith.constant 0 : index
    %c0_18 = arith.constant 0 : index
    %c0_19 = arith.constant 0 : index
    %44 = vector.load %arg3[%c0_17, %c0_18, %c0_19] : memref<1x8x128xf32, #tpu.memory_space<vmem>>, vector<1x1x1xf32>
    tpu.vector_store %arg3[%c0_17, %c0_18, %c0_19], %43 {strides = array<i32>} : memref<1x8x128xf32, #tpu.memory_space<vmem>>, vector<1x1x1xf32>,
    return
  }
  func.func @transform_0(%arg0: i32) -> (i32, i32) {
    %c0_i32 = arith.constant 0 : i32
    %c0_i32_0 = arith.constant 0 : i32
    return %arg0, %c0_i32 : i32, i32
  }
  func.func @transform_1(%arg0: i32) -> (i32, i32) {
    %c0_i32 = arith.constant 0 : i32
    %c0_i32_0 = arith.constant 0 : i32
    return %arg0, %c0_i32 : i32, i32
  }
  func.func @transform_2(%arg0: i32) -> (i32, i32, i32) {
    %c0_i32 = arith.constant 0 : i32
    %c0_i32_0 = arith.constant 0 : i32
    %c0_i32_1 = arith.constant 0 : i32
    return %arg0, %c0_i32, %c0_i32_0 : i32, i32, i32
  }
}

</mosaic_0001>

<llo_original>
// kernel: tpu_custom_call.1
$region0: #{tpu_custom_call.1}
  #allocation0 [shape = 'u32[]', space=smem, size = 0x4, offset = 0x4, fixed_abs, tag = 'smem constant byte address 0x4 - core index']
  #allocation1 [shape = 'u32[144,128]{1,0:T(1,128)}', space=vmem, size = 0x12000, scoped, tag = 'internal scratch']
  %s0 = inlined_call_operand.vmem [shape: f32[32,16], index: 0, kind: input, shape index: {}]
  %s1 = inlined_call_operand.vmem [shape: s32[32,1], index: 1, kind: input, shape index: {}]
  %s2 = inlined_call_operand.hbm [shape: f32[1,8,128], index: 2, kind: output, shape index: {}]
  %s3 = sld [smem:[#allocation0]]
  $region18: #{tpu_custom_call.1} parent=0
    _
  %s5 = ssub.s32 1, %s3
  %s6 = scalar_select 0, %s5, %s3
  $region1: #{tpu_custom_call.1} parent=0
    #allocation2 [shape = 'u8[4096]{0}', space=vmem, size = 0x1000, scoped, tag = 'output window, operand 0, single buffered']
    #allocation3 [shape = 's32[1]{0}', space=sflag, size = 0x4, scoped, tag = 'scoped memory for tpu_custom_call.1']
    %7 = vsyncpa [#allocation3], 0
    // Predicated region
    $region2: #{tpu_custom_call.1} parent=1 // pred_check
      _
    $region3: #{tpu_custom_call.1} parent=1 // pred_check_branch
      %9 = sbr.rel (0) target = $region5
    $region4: #{tpu_custom_call.1} parent=1 // pred_region
      _
    $region5: #{tpu_custom_call.1} parent=1 // pred_fallthru
      _
    // Predicated region
    $region6: #{tpu_custom_call.1} parent=1 // pred_check
      _
    $region7: #{tpu_custom_call.1} parent=1 // pred_check_branch
      %11 = sbr.rel (0) target = $region9
    $region8: #{tpu_custom_call.1} parent=1 // pred_region
      _
    $region9: #{tpu_custom_call.1} parent=1 // pred_fallthru
      _
    %v12 = vld [vmem:[%s0] sm:$0xff]
    %v13 = vld [vmem:[%s0 + $0x8] sm:$0xff]
    %v14 = vld [vmem:[%s0 + $0x10] sm:$0xff]
    %v15 = vld [vmem:[%s0 + $0x18] sm:$0xff]
    %v16 = vld [vmem:[%s1] sm:$0xff]
    %v17 = vld [vmem:[%s1 + $0x8] sm:$0xff]
    %v18 = vld [vmem:[%s1 + $0x10] sm:$0xff]
    %v19 = vld [vmem:[%s1 + $0x18] sm:$0xff]
    %vm20 = vcmask 130048
    %v21 = vsel %vm20, %v12, -inf
    %22 = vmax.xlane.f32.xlu0 %v21
    %v23 = vpop.xlane.xlu0 %22
    %v24 = vsel %vm20, %v13, -inf
    %25 = vmax.xlane.f32.xlu0 %v24
    %v26 = vpop.xlane.xlu0 %25
    %v27 = vsel %vm20, %v14, -inf
    %28 = vmax.xlane.f32.xlu0 %v27
    %v29 = vpop.xlane.xlu0 %28
    %v30 = vsel %vm20, %v15, -inf
    %31 = vmax.xlane.f32.xlu0 %v30
    %v32 = vpop.xlane.xlu0 %31
    %v33 = vsub.f32 %v12, %v23
    %v34 = vsub.f32 %v13, %v26
    %v35 = vsub.f32 %v14, %v29
    %v36 = vsub.f32 %v15, %v32
    %v37 = vmul.f32 %v33, 1.442695
    %v38 = vpow.pop %v37
    %v39 = vmul.f32 %v34, 1.442695
    %v40 = vpow.pop %v39
    %v41 = vmul.f32 %v35, 1.442695
    %v42 = vpow.pop %v41
    %v43 = vmul.f32 %v36, 1.442695
    %v44 = vpow.pop %v43
    %v45 = vsel %vm20, %v38, 0.0
    %46 = vadd.xlane.f32.xlu0 %v45
    %v47 = vpop.xlane.xlu0 %46
    %v48 = vsel %vm20, %v40, 0.0
    %49 = vadd.xlane.f32.xlu0 %v48
    %v50 = vpop.xlane.xlu0 %49
    %v51 = vsel %vm20, %v42, 0.0
    %52 = vadd.xlane.f32.xlu0 %v51
    %v53 = vpop.xlane.xlu0 %52
    %v54 = vsel %vm20, %v44, 0.0
    %55 = vadd.xlane.f32.xlu0 %v54
    %v56 = vpop.xlane.xlu0 %55
    %v57 = vlaneseq
    %v58 = vand.u32 %v57, 127
    %59 = vset.pattern.permute.xlu0 0
    %60 = vperm.xlu0 %59, %v16
    %v61 = vpop.permute.xlu0 %60
    %62 = vset.pattern.permute.xlu0 0
    %63 = vperm.xlu0 %62, %v17
    %v64 = vpop.permute.xlu0 %63
    %65 = vset.pattern.permute.xlu0 0
    %66 = vperm.xlu0 %65, %v18
    %v67 = vpop.permute.xlu0 %66
    %68 = vset.pattern.permute.xlu0 0
    %69 = vperm.xlu0 %68, %v19
    %v70 = vpop.permute.xlu0 %69
    %vm71 = vcmp.eq.s32.totalorder %v58, %v61
    %vm72 = vcmp.eq.s32.totalorder %v58, %v64
    %vm73 = vcmp.eq.s32.totalorder %v58, %v67
    %vm74 = vcmp.eq.s32.totalorder %v58, %v70
    %v75 = vsel %vm71, %v33, 0.0
    %v76 = vsel %vm72, %v34, 0.0
    %v77 = vsel %vm73, %v35, 0.0
    %v78 = vsel %vm74, %v36, 0.0
    %v79 = vsel %vm20, %v75, 0.0
    %80 = vadd.xlane.f32.xlu0 %v79
    %v81 = vpop.xlane.xlu0 %80
    %v82 = vsel %vm20, %v76, 0.0
    %83 = vadd.xlane.f32.xlu0 %v82
    %v84 = vpop.xlane.xlu0 %83
    %v85 = vsel %vm20, %v77, 0.0
    %86 = vadd.xlane.f32.xlu0 %v85
    %v87 = vpop.xlane.xlu0 %86
    %v88 = vsel %vm20, %v78, 0.0
    %89 = vadd.xlane.f32.xlu0 %v88
    %v90 = vpop.xlane.xlu0 %89
    %v91 = vlog2.pop %v47
    %v92 = vmul.f32 %v91, 0.6931472
    %v93 = vlog2.pop %v50
    %v94 = vmul.f32 %v93, 0.6931472
    %v95 = vlog2.pop %v53
    %v96 = vmul.f32 %v95, 0.6931472
    %v97 = vlog2.pop %v56
    %v98 = vmul.f32 %v97, 0.6931472
    %v99 = vsub.f32 %v81, %v92
    %v100 = vsub.f32 %v84, %v94
    %v101 = vsub.f32 %v87, %v96
    %v102 = vsub.f32 %v90, %v98
    %s103 = smul.u32 0, 32
    %v104 = vmul.f32 %v99, 1.442695
    %v105 = vpow.pop %v104
    %v106 = vmul.f32 %v100, 1.442695
    %v107 = vpow.pop %v106
    %v108 = vmul.f32 %v101, 1.442695
    %v109 = vpow.pop %v108
    %v110 = vmul.f32 %v102, 1.442695
    %v111 = vpow.pop %v110
    %v112 = vsub.f32 1.0, %v105
    %v113 = vsub.f32 1.0, %v107
    %v114 = vsub.f32 1.0, %v109
    %v115 = vsub.f32 1.0, %v111
    %v116 = vmax.f32 %v112, 0.0
    %v117 = vmax.f32 %v113, 0.0
    %v118 = vmax.f32 %v114, 0.0
    %v119 = vmax.f32 %v115, 0.0
    %v120 = vmul.f32 %v116, %v116
    %v121 = vmul.f32 %v117, %v117
    %v122 = vmul.f32 %v118, %v118
    %v123 = vmul.f32 %v119, %v119
    %v124 = vmul.f32 %v120, -1.0
    %v125 = vmul.f32 %v121, -1.0
    %v126 = vmul.f32 %v122, -1.0
    %v127 = vmul.f32 %v123, -1.0
    %v128 = vmul.f32 %v124, %v99
    %v129 = vmul.f32 %v125, %v100
    %v130 = vmul.f32 %v126, %v101
    %v131 = vmul.f32 %v127, %v102
    %v132 = vlaneseq
    %v133 = vshrl.u32 %v132, 7
    %v134 = vadd.s32 %v133, 8
    %v135 = vadd.s32 %v133, 16
    %v136 = vadd.s32 %v133, 24
    %v137 = vstv %s103
    %v138 = vadd.s32 %v137, %v133
    %v139 = vadd.s32 %v137, %v134
    %v140 = vadd.s32 %v137, %v135
    %v141 = vadd.s32 %v137, %v136
    %vm142 = vcmp.lt.s32.totalorder %v138, 32
    %vm143 = vcmp.lt.s32.totalorder %v139, 32
    %vm144 = vcmp.lt.s32.totalorder %v140, 32
    %vm145 = vcmp.lt.s32.totalorder %v141, 32
    %v146 = vsel %vm142, %v128, 0.0
    %v147 = vsel %vm143, %v129, 0.0
    %v148 = vsel %vm144, %v130, 0.0
    %v149 = vsel %vm145, %v131, 0.0
    %150 = vst [vmem:[#allocation2] sm:$0xff] 0.0
    %vm151 = vcmask 7168
    %v152 = vsel %vm151, %v146, 0.0
    %v153 = vsel %vm151, %v147, 0.0
    %v154 = vadd.f32 %v152, %v153
    %v155 = vsel %vm151, %v148, 0.0
    %v156 = vadd.f32 %v154, %v155
    %v157 = vsel %vm151, %v149, 0.0
    %v158 = vadd.f32 %v156, %v157
    %159 = vadd.xlane.f32.xlu0 %v158
    %v160 = vpop.xlane.xlu0 %159
    %v161 = vrot.slane %v160, 4
    %v162 = vadd.f32 %v160, %v161
    %v163 = vrot.slane %v162, 2
    %v164 = vadd.f32 %v162, %v163
    %v165 = vrot.slane %v164, 1
    %v166 = vadd.f32 %v164, %v165
    %s167 = vtos %v166
    %v168 = vstv %s167
    %vm169 = vcmask 0
    %170 = vst.msk [vmem:[#allocation2] sm:$0x1] %vm169, %v168
    // Predicated region
    $region10: #{tpu_custom_call.1} parent=1 // pred_check
      _
    $region11: #{tpu_custom_call.1} parent=1 // pred_check_branch
      %172 = sbr.rel (0) target = $region13
    $region12: #{tpu_custom_call.1} parent=1 // pred_region
      %s174 = ssub.s32 128, 128
      %175 = vsyncadd [#allocation3], %s174
      %s177 = sshll.u32 [#allocation2], 4
      %s178 = int_to_ptr.vmem [resolvable:$true] %s177
      %180 = dma.vmem_to_hbm [thread:$0]  %s178, 128, %s2, [#allocation3]
    $region13: #{tpu_custom_call.1} parent=1 // pred_fallthru
      _
    // Predicated region
    $region14: #{tpu_custom_call.1} parent=1 // pred_check
      _
    $region15: #{tpu_custom_call.1} parent=1 // pred_check_branch
      %182 = sbr.rel (0) target = $region17
    $region16: #{tpu_custom_call.1} parent=1 // pred_region
      %183 = dma.done [#allocation3], 128
    $region17: #{tpu_custom_call.1} parent=1 // pred_fallthru
      _
    %184 = vsyncpa [#allocation3], 1

</llo_original>
